<compile_context>
chip_gen: v7x
topology: tpu7x:2x2x1
jax: 0.10.0
libtpu: 0.0.40
codegen_flags: <defaults>
</compile_context>

<pallas_src>
import math

import jax
import jax.numpy as jnp
from jax.experimental import pallas as pl
from jax.experimental.pallas import tpu as pltpu

LOG_STD_MAX = 2.0
LOG_STD_MIN = -5.0
_HALF_LOG_2PI = 0.5 * math.log(2.0 * math.pi)


def _round_up(x, m):
    return (x + m - 1) // m * m


def _physical_vmem_bytes():
    try:
        return int(pltpu.get_tpu_info().vmem_capacity_bytes)
    except Exception:
        return 64 * 1024 * 1024  # conservative (v7x per-TC VMEM)


def _actor_kernel(x_ref, w1_ref, b1_ref, w2_ref, b2_ref, w3_ref, b3_ref,
                  eps_ref, out_ref):
    """One batch tile of the Actor forward pass (all dims lane-padded).

    x_ref: (TB, Sp), eps_ref: (TB, Ap).  Weights are (in, out) with zero
    padding, biases (1, out).  The fused head weight w3_ref is (Hp, 2*Ap):
    lanes [0, Ap) -> mu, lanes [Ap, 2*Ap) -> log_std.  MXU inputs follow the
    weight dtype (f32 or bf16); accumulation and the elementwise tail are f32.
    out_ref: (TB, 3*Ap) = [mode | samples | logp], each section 128-aligned.
    """
    wdt = w1_ref.dtype
    ap = eps_ref.shape[1]

    x = x_ref[...].astype(wdt)

    # trunk: Linear -> ReLU -> Linear -> ReLU -> fused [mu | log_std] head
    h1 = jnp.dot(x, w1_ref[...], preferred_element_type=jnp.float32)
    h1 = jnp.maximum(h1 + b1_ref[...], 0.0).astype(wdt)

    h2 = jnp.dot(h1, w2_ref[...], preferred_element_type=jnp.float32)
    h2 = jnp.maximum(h2 + b2_ref[...], 0.0).astype(wdt)

    head = jnp.dot(h2, w3_ref[...], preferred_element_type=jnp.float32)
    head = head + b3_ref[...]

    mu = head[:, :ap]                      # 128-aligned static slices (free)
    log_std = jnp.tanh(head[:, ap:])
    log_std = LOG_STD_MIN + 0.5 * (LOG_STD_MAX - LOG_STD_MIN) * (log_std + 1.0)
    std = jnp.exp(log_std)

    eps = eps_ref[...]

    # Lane-dense stores: each section is a 128-multiple-aligned unmasked vst.
    out_ref[:, :ap] = jnp.tanh(mu)                                   # mode
    out_ref[:, ap:2 * ap] = mu + std * eps                           # samples
    out_ref[:, 2 * ap:] = -0.5 * eps * eps - log_std - _HALF_LOG_2PI  # logp


def actor_forward(states, params, eps, *, block_b=None, mxu_dtype=jnp.bfloat16):
    """Actor forward as a batch-tiled, lane-dense Pallas kernel.

    states: (B, state_dim) f32
    params: w1 (S,H), b1 (1,H), w2 (H,H), b2 (1,H), w3 (H,2A), b3 (1,2A),
            with w3/b3 columns laid out [mu | log_std] (PyTorch ordering).
    eps:    (B, A) standard-normal noise used for rsample().
    block_b:  max batch tile; default chosen per TPU generation.
    mxu_dtype: jnp.bfloat16 (default, native MXU path) or None for exact f32.
    returns (mode, samples, log_probs), each (B, A) f32.
    """
    B, S = states.shape
    A = eps.shape[1]
    H = params["w1"].shape[1]
    assert params["w3"].shape[1] == 2 * A

    states = states.astype(jnp.float32)
    eps = eps.astype(jnp.float32)

    phys_vmem = _physical_vmem_bytes()
    if block_b is None:
        # v5e/v6e (128 MiB VMEM): big tiles; v7x (64 MiB): smaller tiles.
        block_b = 1024 if phys_vmem >= 96 * 1024 * 1024 else 512

    # Batch tile: multiple of 8 sublanes, capped by block_b.  Aim for >= 2
    # tiles whenever the batch allows it so v7x's two TensorCores both get
    # work under dimension_semantics=("parallel",).
    target = -(-B // 2) if B > 8 else B
    TB = max(8, min(block_b, _round_up(target, 8)))
    Bp = _round_up(B, TB)

    # Lane-align every feature dimension (zero padding is exact: ReLU(0)=0 and
    # padded weight rows/cols are zero, so padded lanes never leak into the
    # real outputs; padded outputs are sliced away below).
    Sp = _round_up(S, 128)
    Hp = _round_up(H, 128)
    Ap = _round_up(A, 128)

    wdt = jnp.float32 if mxu_dtype is None else mxu_dtype

    def pad2(a, rows, cols):
        a = a.astype(jnp.float32).reshape(a.shape[0] if a.ndim == 2 else 1, -1)
        return jnp.pad(a, ((0, rows - a.shape[0]), (0, cols - a.shape[1])))

    w1p = pad2(params["w1"], Sp, Hp).astype(wdt)
    b1p = pad2(params["b1"], 1, Hp)
    w2p = pad2(params["w2"], Hp, Hp).astype(wdt)
    b2p = pad2(params["b2"], 1, Hp)

    # Fused lane-aligned head: columns [0,Ap) = mu weights, [Ap,2Ap) = log_std.
    w3 = params["w3"].astype(jnp.float32)
    b3 = params["b3"].astype(jnp.float32).reshape(1, -1)
    w3p = jnp.zeros((Hp, 2 * Ap), jnp.float32)
    w3p = w3p.at[:H, :A].set(w3[:, :A]).at[:H, Ap:Ap + A].set(w3[:, A:])
    w3p = w3p.astype(wdt)
    b3p = jnp.zeros((1, 2 * Ap), jnp.float32)
    b3p = b3p.at[:, :A].set(b3[:, :A]).at[:, Ap:Ap + A].set(b3[:, A:])

    states_p = jnp.zeros((Bp, Sp), jnp.float32).at[:B, :S].set(states)
    eps_p = jnp.zeros((Bp, Ap), jnp.float32).at[:B, :A].set(eps)

    grid = (Bp // TB,)

    def tile_spec(cols):
        return pl.BlockSpec((TB, cols), lambda i: (i, 0))

    def resident(arr):  # full array, constant block index -> stays in VMEM
        return pl.BlockSpec(arr.shape, lambda i: (0, 0))

    in_specs = [
        tile_spec(Sp),                       # states
        resident(w1p), resident(b1p),
        resident(w2p), resident(b2p),
        resident(w3p), resident(b3p),
        tile_spec(Ap),                       # eps
    ]
    out_specs = pl.BlockSpec((TB, 3 * Ap), lambda i: (i, 0))

    # VMEM budget: double-buffered streamed tiles + resident weights (2 bufs
    # each) + f32 activation headroom; clamp to a per-generation cap.
    itemsize = jnp.dtype(wdt).itemsize
    stream_bytes = 2 * 4 * TB * (Sp + Ap + 3 * Ap)
    weight_bytes = 2 * (itemsize * (Sp * Hp + Hp * Hp + 2 * Hp * Ap)
                        + 4 * (2 * Hp + 2 * Ap))
    act_bytes = 2 * 4 * TB * (2 * Hp + 2 * Ap)
    vmem_est = stream_bytes + weight_bytes + act_bytes
    vmem_cap = min(phys_vmem * 3 // 4, 100 * 1024 * 1024)
    vmem_limit = int(min(max(2 * vmem_est, 32 * 1024 * 1024), vmem_cap))

    cost = pl.CostEstimate(
        flops=2 * Bp * (Sp * Hp + Hp * Hp + 2 * Hp * Ap),
        transcendentals=3 * Bp * Ap,          # tanh(mu), tanh(log_std), exp
        bytes_accessed=(4 * Bp * (Sp + Ap + 3 * Ap)
                        + itemsize * (Sp * Hp + Hp * Hp + 2 * Hp * Ap)
                        + 4 * (2 * Hp + 2 * Ap)),
    )

    packed = pl.pallas_call(
        _actor_kernel,
        out_shape=jax.ShapeDtypeStruct((Bp, 3 * Ap), jnp.float32),
        grid=grid,
        in_specs=in_specs,
        out_specs=out_specs,
        compiler_params=pltpu.CompilerParams(
            dimension_semantics=("parallel",),   # shard batch tiles on v7x TCs
            vmem_limit_bytes=vmem_limit,
        ),
        cost_estimate=cost,
    )(states_p, w1p, b1p, w2p, b2p, w3p, b3p, eps_p)

    mode = packed[:B, :A]
    samples = packed[:B, Ap:Ap + A]
    log_probs = packed[:B, 2 * Ap:2 * Ap + A]
    return mode, samples, log_probs


def init_actor_params(key, state_dim, hidden_dim, action_dim):
    """Deterministic parameter init mimicking nn.Linear's uniform init."""
    def linear(k, fan_in, fan_out):
        kw, kb = jax.random.split(k)
        bound = 1.0 / math.sqrt(fan_in)
        w = jax.random.uniform(kw, (fan_in, fan_out), jnp.float32, -bound, bound)
        b = jax.random.uniform(kb, (1, fan_out), jnp.float32, -bound, bound)
        return w, b

    k1, k2, k3 = jax.random.split(key, 3)
    w1, b1 = linear(k1, state_dim, hidden_dim)
    w2, b2 = linear(k2, hidden_dim, hidden_dim)
    w3, b3 = linear(k3, hidden_dim, action_dim * 2)   # columns = [mu | log_std]
    return {"w1": w1, "b1": b1, "w2": w2, "b2": b2, "w3": w3, "b3": b3}


def actor_forward_ref(states, params, eps):
    """Pure-JAX reference for correctness checking."""
    h1 = jnp.maximum(states @ params["w1"] + params["b1"], 0.0)
    h2 = jnp.maximum(h1 @ params["w2"] + params["b2"], 0.0)
    out = h2 @ params["w3"] + params["b3"]
    A = eps.shape[1]
    mu, log_std_raw = out[:, :A], out[:, A:]
    mode = jnp.tanh(mu)
    log_std = jnp.tanh(log_std_raw)
    log_std = LOG_STD_MIN + 0.5 * (LOG_STD_MAX - LOG_STD_MIN) * (log_std + 1.0)
    std = jnp.exp(log_std)
    samples = mu + std * eps
    logp = -0.5 * eps * eps - log_std - _HALF_LOG_2PI
    return mode, samples, logp


if __name__ == "__main__":
    # NOTE: log_prob here is per-dimension Normal(mu, std).log_prob with no
    # tanh-squash Jacobian correction and `samples` is the un-squashed rsample,
    # exactly matching the reference PyTorch module's forward().
    state_dim, hidden_dim, action_dim = 16, 32, 8
    batch = 48  # not a multiple of the tile -> exercises padding + 2-tile grid

    key = jax.random.PRNGKey(0)
    k_params, k_states, k_eps = jax.random.split(key, 3)

    params = init_actor_params(k_params, state_dim, hidden_dim, action_dim)
    states = jax.random.normal(k_states, (batch, state_dim), jnp.float32)
    eps = jax.random.normal(k_eps, (batch, action_dim), jnp.float32)

    mode_r, samples_r, logp_r = actor_forward_ref(states, params, eps)

    # Exact f32 MXU path: tight tolerance.
    mode, samples, log_probs = actor_forward(states, params, eps,
                                             mxu_dtype=None)
    jax.block_until_ready((mode, samples, log_probs))
    assert jnp.allclose(mode, mode_r, atol=1e-5, rtol=1e-5)
    assert jnp.allclose(samples, samples_r, atol=1e-5, rtol=1e-5)
    assert jnp.allclose(log_probs, logp_r, atol=1e-5, rtol=1e-5)

    # Default bf16 MXU path (f32 accumulation / f32 tail): loose smoke check.
    mode_b, samples_b, logp_b = actor_forward(states, params, eps)
    jax.block_until_ready((mode_b, samples_b, logp_b))
    assert jnp.allclose(mode_b, mode_r, atol=2e-1, rtol=1e-1)
    assert jnp.allclose(samples_b, samples_r, atol=2e-1, rtol=1e-1)
    assert jnp.allclose(logp_b, logp_r, atol=2e-1, rtol=1e-1)

    print("KERNEL_OK")
</pallas_src>

<mosaic_0001>
module attributes {stable_mosaic.version = 11 : i64} {
  func.func @_actor_kernel(%arg0: i32, %arg1: memref<24x128xf32, #tpu.memory_space<vmem>>, %arg2: memref<128x128xf32, #tpu.memory_space<vmem>>, %arg3: memref<1x128xf32, #tpu.memory_space<vmem>>, %arg4: memref<128x128xf32, #tpu.memory_space<vmem>>, %arg5: memref<1x128xf32, #tpu.memory_space<vmem>>, %arg6: memref<128x256xf32, #tpu.memory_space<vmem>>, %arg7: memref<1x256xf32, #tpu.memory_space<vmem>>, %arg8: memref<24x128xf32, #tpu.memory_space<vmem>>, %arg9: memref<24x384xf32, #tpu.memory_space<vmem>>) attributes {dimension_semantics = [#tpu.dimension_semantics<parallel>], iteration_bounds = array<i64: 2>, scalar_prefetch = 0 : i64, scratch_operands = 0 : i64, tpu.core_type = #tpu.core_type<tc>, window_params = [{transform_indices = @transform_0, window_bounds = array<i64: 24, 128>}, {pipeline_mode = #tpu.pipeline_mode<synchronous>, transform_indices = @transform_1, window_bounds = array<i64: 128, 128>}, {pipeline_mode = #tpu.pipeline_mode<synchronous>, transform_indices = @transform_2, window_bounds = array<i64: 1, 128>}, {pipeline_mode = #tpu.pipeline_mode<synchronous>, transform_indices = @transform_3, window_bounds = array<i64: 128, 128>}, {pipeline_mode = #tpu.pipeline_mode<synchronous>, transform_indices = @transform_4, window_bounds = array<i64: 1, 128>}, {pipeline_mode = #tpu.pipeline_mode<synchronous>, transform_indices = @transform_5, window_bounds = array<i64: 128, 256>}, {pipeline_mode = #tpu.pipeline_mode<synchronous>, transform_indices = @transform_6, window_bounds = array<i64: 1, 256>}, {transform_indices = @transform_7, window_bounds = array<i64: 24, 128>}, {transform_indices = @transform_8, window_bounds = array<i64: 24, 384>}]} {
    %c0 = arith.constant 0 : index
    %c0_0 = arith.constant 0 : index
    %0 = vector.load %arg1[%c0, %c0_0] : memref<24x128xf32, #tpu.memory_space<vmem>>, vector<24x128xf32>
    %c0_1 = arith.constant 0 : index
    %c0_2 = arith.constant 0 : index
    %1 = vector.load %arg2[%c0_1, %c0_2] : memref<128x128xf32, #tpu.memory_space<vmem>>, vector<128x128xf32>
    %cst = arith.constant dense<0.000000e+00> : vector<24x128xf32>
    %2 = tpu.matmul %0, %1, %cst {dimension_numbers = #tpu.dot_dimension_numbers<[1], [0], [0], [1], [0, 0, 1, 1], [], []>} : vector<24x128xf32>, vector<128x128xf32>, vector<24x128xf32> -> vector<24x128xf32>
    %c0_3 = arith.constant 0 : index
    %c0_4 = arith.constant 0 : index
    %3 = vector.load %arg3[%c0_3, %c0_4] : memref<1x128xf32, #tpu.memory_space<vmem>>, vector<1x128xf32>
    %4 = vector.broadcast %3 : vector<1x128xf32> to vector<24x128xf32>
    %5 = arith.addf %2, %4 : vector<24x128xf32>
    %cst_5 = arith.constant 0.000000e+00 : f32
    %6 = vector.broadcast %cst_5 : f32 to vector<24x128xf32>
    %7 = arith.maximumf %5, %6 : vector<24x128xf32>
    %c0_6 = arith.constant 0 : index
    %c0_7 = arith.constant 0 : index
    %8 = vector.load %arg4[%c0_6, %c0_7] : memref<128x128xf32, #tpu.memory_space<vmem>>, vector<128x128xf32>
    %cst_8 = arith.constant dense<0.000000e+00> : vector<24x128xf32>
    %9 = tpu.matmul %7, %8, %cst_8 {dimension_numbers = #tpu.dot_dimension_numbers<[1], [0], [0], [1], [0, 0, 1, 1], [], []>} : vector<24x128xf32>, vector<128x128xf32>, vector<24x128xf32> -> vector<24x128xf32>
    %c0_9 = arith.constant 0 : index
    %c0_10 = arith.constant 0 : index
    %10 = vector.load %arg5[%c0_9, %c0_10] : memref<1x128xf32, #tpu.memory_space<vmem>>, vector<1x128xf32>
    %11 = vector.broadcast %10 : vector<1x128xf32> to vector<24x128xf32>
    %12 = arith.addf %9, %11 : vector<24x128xf32>
    %cst_11 = arith.constant 0.000000e+00 : f32
    %13 = vector.broadcast %cst_11 : f32 to vector<24x128xf32>
    %14 = arith.maximumf %12, %13 : vector<24x128xf32>
    %c0_12 = arith.constant 0 : index
    %c0_13 = arith.constant 0 : index
    %15 = vector.load %arg6[%c0_12, %c0_13] : memref<128x256xf32, #tpu.memory_space<vmem>>, vector<128x256xf32>
    %cst_14 = arith.constant dense<0.000000e+00> : vector<24x256xf32>
    %16 = tpu.matmul %14, %15, %cst_14 {dimension_numbers = #tpu.dot_dimension_numbers<[1], [0], [0], [1], [0, 0, 1, 1], [], []>} : vector<24x128xf32>, vector<128x256xf32>, vector<24x256xf32> -> vector<24x256xf32>
    %c0_15 = arith.constant 0 : index
    %c0_16 = arith.constant 0 : index
    %17 = vector.load %arg7[%c0_15, %c0_16] : memref<1x256xf32, #tpu.memory_space<vmem>>, vector<1x256xf32>
    %18 = vector.broadcast %17 : vector<1x256xf32> to vector<24x256xf32>
    %19 = arith.addf %16, %18 : vector<24x256xf32>
    %20 = vector.extract_strided_slice %19 {offsets = [0, 0], sizes = [24, 128], strides = [1, 1]} : vector<24x256xf32> to vector<24x128xf32>
    %21 = vector.extract_strided_slice %19 {offsets = [0, 128], sizes = [24, 128], strides = [1, 1]} : vector<24x256xf32> to vector<24x128xf32>
    %22 = math.tanh %21 : vector<24x128xf32>
    %cst_17 = arith.constant 1.000000e+00 : f32
    %23 = vector.broadcast %cst_17 : f32 to vector<24x128xf32>
    %24 = arith.addf %22, %23 : vector<24x128xf32>
    %cst_18 = arith.constant 3.500000e+00 : f32
    %25 = vector.broadcast %cst_18 : f32 to vector<24x128xf32>
    %26 = arith.mulf %25, %24 : vector<24x128xf32>
    %cst_19 = arith.constant -5.000000e+00 : f32
    %27 = vector.broadcast %cst_19 : f32 to vector<24x128xf32>
    %28 = arith.addf %27, %26 : vector<24x128xf32>
    %29 = math.exp %28 : vector<24x128xf32>
    %c0_20 = arith.constant 0 : index
    %c0_21 = arith.constant 0 : index
    %30 = vector.load %arg8[%c0_20, %c0_21] : memref<24x128xf32, #tpu.memory_space<vmem>>, vector<24x128xf32>
    %31 = math.tanh %20 : vector<24x128xf32>
    %c0_22 = arith.constant 0 : index
    %c0_23 = arith.constant 0 : index
    %32 = vector.load %arg9[%c0_22, %c0_23] : memref<24x384xf32, #tpu.memory_space<vmem>>, vector<24x128xf32>
    tpu.vector_store %arg9[%c0_22, %c0_23], %31 {strides = array<i32>} : memref<24x384xf32, #tpu.memory_space<vmem>>, vector<24x128xf32>,
    %33 = arith.mulf %29, %30 : vector<24x128xf32>
    %34 = arith.addf %20, %33 : vector<24x128xf32>
    %c0_24 = arith.constant 0 : index
    %c128 = arith.constant 128 : index
    %35 = vector.load %arg9[%c0_24, %c128] : memref<24x384xf32, #tpu.memory_space<vmem>>, vector<24x128xf32>
    tpu.vector_store %arg9[%c0_24, %c128], %34 {strides = array<i32>} : memref<24x384xf32, #tpu.memory_space<vmem>>, vector<24x128xf32>,
    %cst_25 = arith.constant -5.000000e-01 : f32
    %36 = vector.broadcast %cst_25 : f32 to vector<24x128xf32>
    %37 = arith.mulf %36, %30 : vector<24x128xf32>
    %38 = arith.mulf %37, %30 : vector<24x128xf32>
    %39 = arith.subf %38, %28 : vector<24x128xf32>
    %cst_26 = arith.constant 0.918938517 : f32
    %40 = vector.broadcast %cst_26 : f32 to vector<24x128xf32>
    %41 = arith.subf %39, %40 : vector<24x128xf32>
    %c0_27 = arith.constant 0 : index
    %c256 = arith.constant 256 : index
    %42 = vector.load %arg9[%c0_27, %c256] : memref<24x384xf32, #tpu.memory_space<vmem>>, vector<24x128xf32>
    tpu.vector_store %arg9[%c0_27, %c256], %41 {strides = array<i32>} : memref<24x384xf32, #tpu.memory_space<vmem>>, vector<24x128xf32>,
    return
  }
  func.func @transform_0(%arg0: i32) -> (i32, i32) {
    %c0_i32 = arith.constant 0 : i32
    %c0_i32_0 = arith.constant 0 : i32
    return %arg0, %c0_i32 : i32, i32
  }
  func.func @transform_1(%arg0: i32) -> (i32, i32) {
    %c0_i32 = arith.constant 0 : i32
    %c0_i32_0 = arith.constant 0 : i32
    %c0_i32_1 = arith.constant 0 : i32
    return %c0_i32, %c0_i32_0 : i32, i32
  }
  func.func @transform_2(%arg0: i32) -> (i32, i32) {
    %c0_i32 = arith.constant 0 : i32
    %c0_i32_0 = arith.constant 0 : i32
    %c0_i32_1 = arith.constant 0 : i32
    return %c0_i32, %c0_i32_0 : i32, i32
  }
  func.func @transform_3(%arg0: i32) -> (i32, i32) {
    %c0_i32 = arith.constant 0 : i32
    %c0_i32_0 = arith.constant 0 : i32
    %c0_i32_1 = arith.constant 0 : i32
    return %c0_i32, %c0_i32_0 : i32, i32
  }
  func.func @transform_4(%arg0: i32) -> (i32, i32) {
    %c0_i32 = arith.constant 0 : i32
    %c0_i32_0 = arith.constant 0 : i32
    %c0_i32_1 = arith.constant 0 : i32
    return %c0_i32, %c0_i32_0 : i32, i32
  }
  func.func @transform_5(%arg0: i32) -> (i32, i32) {
    %c0_i32 = arith.constant 0 : i32
    %c0_i32_0 = arith.constant 0 : i32
    %c0_i32_1 = arith.constant 0 : i32
    return %c0_i32, %c0_i32_0 : i32, i32
  }
  func.func @transform_6(%arg0: i32) -> (i32, i32) {
    %c0_i32 = arith.constant 0 : i32
    %c0_i32_0 = arith.constant 0 : i32
    %c0_i32_1 = arith.constant 0 : i32
    return %c0_i32, %c0_i32_0 : i32, i32
  }
  func.func @transform_7(%arg0: i32) -> (i32, i32) {
    %c0_i32 = arith.constant 0 : i32
    %c0_i32_0 = arith.constant 0 : i32
    return %arg0, %c0_i32 : i32, i32
  }
  func.func @transform_8(%arg0: i32) -> (i32, i32) {
    %c0_i32 = arith.constant 0 : i32
    %c0_i32_0 = arith.constant 0 : i32
    return %arg0, %c0_i32 : i32, i32
  }
}

</mosaic_0001>

<llo_original>
// kernel: tpu_custom_call.1
$region0: #{tpu_custom_call.1}
  #allocation0 [shape = 'u32[]', space=smem, size = 0x4, offset = 0x4, fixed_abs, tag = 'smem constant byte address 0x4 - core index']
  #allocation1 [shape = 'u32[144,128]{1,0:T(1,128)}', space=vmem, size = 0x12000, scoped, tag = 'internal scratch']
  %s0 = inlined_call_operand.hbm [shape: f32[48,128], index: 0, kind: input, shape index: {}]
  %s1 = inlined_call_operand.hbm [shape: f32[128,128], index: 1, kind: input, shape index: {}]
  %s2 = inlined_call_operand.vmem [shape: f32[1,128], index: 2, kind: input, shape index: {}]
  %s3 = inlined_call_operand.hbm [shape: f32[128,128], index: 3, kind: input, shape index: {}]
  %s4 = inlined_call_operand.vmem [shape: f32[1,128], index: 4, kind: input, shape index: {}]
  %s5 = inlined_call_operand.hbm [shape: f32[128,256], index: 5, kind: input, shape index: {}]
  %s6 = inlined_call_operand.vmem [shape: f32[1,256], index: 6, kind: input, shape index: {}]
  %s7 = inlined_call_operand.hbm [shape: f32[48,128], index: 7, kind: input, shape index: {}]
  %s8 = inlined_call_operand.hbm [shape: f32[48,384], index: 8, kind: output, shape index: {}]
  %s9 = sld [smem:[#allocation0]]
  $region85: #{tpu_custom_call.1} parent=0
    _
  %s11 = ssub.s32 1, %s9
  %s12 = scalar_select 0, %s11, %s9
  $region1: #{tpu_custom_call.1} parent=0
    #allocation2 [shape = 'u8[24576]{0}', space=vmem, size = 0x6000, scoped, tag = 'input window, operand 0']
    #allocation3 [shape = 's32[2]{0}', space=sflag, size = 0x8, scoped, tag = 'scoped memory for tpu_custom_call.1']
    #allocation4 [shape = 's32[2]{0}', space=sflag, size = 0x8, scoped, tag = 'scoped memory for tpu_custom_call.1']
    #allocation5 [shape = 'u8[65536]{0}', space=vmem, size = 0x10000, scoped, tag = 'input window, operand 1, single buffered']
    #allocation6 [shape = 's32[1]{0}', space=sflag, size = 0x4, scoped, tag = 'scoped memory for tpu_custom_call.1']
    #allocation7 [shape = 'u8[65536]{0}', space=vmem, size = 0x10000, scoped, tag = 'input window, operand 3, single buffered']
    #allocation8 [shape = 'u8[131072]{0}', space=vmem, size = 0x20000, scoped, tag = 'input window, operand 5, single buffered']
    #allocation9 [shape = 's32[1]{0}', space=sflag, size = 0x4, scoped, tag = 'scoped memory for tpu_custom_call.1']
    #allocation10 [shape = 'u8[24576]{0}', space=vmem, size = 0x6000, scoped, tag = 'input window, operand 7']
    #allocation11 [shape = 'u8[73728]{0}', space=vmem, size = 0x12000, scoped, tag = 'output window, operand 0']
    %13 = vsyncpa [#allocation3], 0
    %s14 = scalar_lea.sflag [#allocation3], 1
    %15 = vsyncpa %s14, 0
    %16 = vsyncpa [#allocation6], 0
    %17 = vsyncpa [#allocation9], 0
    %18 = vsyncpa [#allocation4], 0
    %s19 = scalar_lea.sflag [#allocation4], 1
    %20 = vsyncpa %s19, 0
    loop: start=0, step=1, limit=4
    $region2: #{tpu_custom_call.1} parent=1 // loop_pre_header
      _
    $region3: #{tpu_custom_call.1} parent=1 // loop_header
      %s22 = sphi 0, %s26
      %p23 = scmp.ge.s32.totalorder %s22, 4
      %s32 = sphi 0, %s34
      %s35 = sphi 0, %s32
      %s36 = sphi 0, %s35
      %s52 = sphi 0, %s36
      %s56 = sphi 0, %s56
      %s58 = sphi 0, %s56
      %s59 = sphi 0, %s58
      %s73 = sphi 0, %s59
      %s77 = sphi 0, %s77
      %s79 = sphi 0, %s77
      %s80 = sphi 0, %s79
      %s94 = sphi 0, %s80
      %s98 = sphi 0, %s98
      %s100 = sphi 0, %s98
      %s101 = sphi 0, %s100
      %s115 = sphi 0, %s101
      %s119 = sphi 0, %s119
      %s121 = sphi 0, %s119
      %s122 = sphi 0, %s121
      %s136 = sphi 0, %s122
      %s140 = sphi 0, %s140
      %s142 = sphi 0, %s140
      %s143 = sphi 0, %s142
      %s157 = sphi 0, %s143
      %s161 = sphi 0, %s161
      %s163 = sphi 0, %s161
      %s164 = sphi 0, %s163
      %s178 = sphi 0, %s164
      %s184 = sphi 0, %s186
      %s187 = sphi 0, %s184
      %s188 = sphi 0, %s187
      %s204 = sphi 0, %s188
      %s210 = sphi 0, %s212
      %s213 = sphi 0, %s210
      %s214 = sphi 0, %s213
      %s230 = sphi 0, %s214
    $region4: #{tpu_custom_call.1} parent=1 // loop_header_branch
      %25 = sbr.rel (%p23) target = $region8
    $region5: #{tpu_custom_call.1} parent=1 // loop_body
      %s27 = ssub.s32 %s22, 1
      %s28 = ssub.s32 %s22, 2
      %s29 = sadd.s32 %s22, 1
      %s30 = ssub.s32 %s22, %s29
      %p31 = scmp.eq.s32.totalorder %s30, 0
      %s33 = sadd.s32 %s32, 1
      %s34 = scalar_select %p31, %s32, %s33
      %p37 = pneg %p31
      %p38 = scmp.eq.s32.totalorder %s22, 1
      %p39 = por %p37, %p38
      %p40 = scmp.ne.s32.totalorder %s32, %s35
      %p41 = scmp.eq.s32.totalorder %s22, 0
      %p42 = por %p40, %p41
      %p43 = scmp.ne.s32.totalorder %s32, %s35
      %p44 = scmp.eq.s32.totalorder %s27, 1
      %p45 = por %p43, %p44
      %p46 = scmp.ne.s32.totalorder %s35, %s36
      %p47 = scmp.eq.s32.totalorder %s27, 0
      %p48 = por %p46, %p47
      %p49 = scmp.ne.s32.totalorder %s35, %s36
      %p50 = scmp.eq.s32.totalorder %s28, 1
      %p51 = por %p49, %p50
      %p53 = scmp.ne.s32.totalorder %s36, %s52
      %p54 = scmp.eq.s32.totalorder %s28, 0
      %p55 = por %p53, %p54
      %s57 = sadd.s32 %s56, 1
      %p60 = scmp.eq.s32.totalorder %s22, 1
      %p61 = scmp.ne.s32.totalorder %s56, %s58
      %p62 = scmp.eq.s32.totalorder %s22, 0
      %p63 = por %p61, %p62
      %p64 = scmp.ne.s32.totalorder %s56, %s58
      %p65 = scmp.eq.s32.totalorder %s27, 1
      %p66 = por %p64, %p65
      %p67 = scmp.ne.s32.totalorder %s58, %s59
      %p68 = scmp.eq.s32.totalorder %s27, 0
      %p69 = por %p67, %p68
      %p70 = scmp.ne.s32.totalorder %s58, %s59
      %p71 = scmp.eq.s32.totalorder %s28, 1
      %p72 = por %p70, %p71
      %p74 = scmp.ne.s32.totalorder %s59, %s73
      %p75 = scmp.eq.s32.totalorder %s28, 0
      %p76 = por %p74, %p75
      %s78 = sadd.s32 %s77, 1
      %p81 = scmp.eq.s32.totalorder %s22, 1
      %p82 = scmp.ne.s32.totalorder %s77, %s79
      %p83 = scmp.eq.s32.totalorder %s22, 0
      %p84 = por %p82, %p83
      %p85 = scmp.ne.s32.totalorder %s77, %s79
      %p86 = scmp.eq.s32.totalorder %s27, 1
      %p87 = por %p85, %p86
      %p88 = scmp.ne.s32.totalorder %s79, %s80
      %p89 = scmp.eq.s32.totalorder %s27, 0
      %p90 = por %p88, %p89
      %p91 = scmp.ne.s32.totalorder %s79, %s80
      %p92 = scmp.eq.s32.totalorder %s28, 1
      %p93 = por %p91, %p92
      %p95 = scmp.ne.s32.totalorder %s80, %s94
      %p96 = scmp.eq.s32.totalorder %s28, 0
      %p97 = por %p95, %p96
      %s99 = sadd.s32 %s98, 1
      %p102 = scmp.eq.s32.totalorder %s22, 1
      %p103 = scmp.ne.s32.totalorder %s98, %s100
      %p104 = scmp.eq.s32.totalorder %s22, 0
      %p105 = por %p103, %p104
      %p106 = scmp.ne.s32.totalorder %s98, %s100
      %p107 = scmp.eq.s32.totalorder %s27, 1
      %p108 = por %p106, %p107
      %p109 = scmp.ne.s32.totalorder %s100, %s101
      %p110 = scmp.eq.s32.totalorder %s27, 0
      %p111 = por %p109, %p110
      %p112 = scmp.ne.s32.totalorder %s100, %s101
      %p113 = scmp.eq.s32.totalorder %s28, 1
      %p114 = por %p112, %p113
      %p116 = scmp.ne.s32.totalorder %s101, %s115
      %p117 = scmp.eq.s32.totalorder %s28, 0
      %p118 = por %p116, %p117
      %s120 = sadd.s32 %s119, 1
      %p123 = scmp.eq.s32.totalorder %s22, 1
      %p124 = scmp.ne.s32.totalorder %s119, %s121
      %p125 = scmp.eq.s32.totalorder %s22, 0
      %p126 = por %p124, %p125
      %p127 = scmp.ne.s32.totalorder %s119, %s121
      %p128 = scmp.eq.s32.totalorder %s27, 1
      %p129 = por %p127, %p128
      %p130 = scmp.ne.s32.totalorder %s121, %s122
      %p131 = scmp.eq.s32.totalorder %s27, 0
      %p132 = por %p130, %p131
      %p133 = scmp.ne.s32.totalorder %s121, %s122
      %p134 = scmp.eq.s32.totalorder %s28, 1
      %p135 = por %p133, %p134
      %p137 = scmp.ne.s32.totalorder %s122, %s136
      %p138 = scmp.eq.s32.totalorder %s28, 0
      %p139 = por %p137, %p138
      %s141 = sadd.s32 %s140, 1
      %p144 = scmp.eq.s32.totalorder %s22, 1
      %p145 = scmp.ne.s32.totalorder %s140, %s142
      %p146 = scmp.eq.s32.totalorder %s22, 0
      %p147 = por %p145, %p146
      %p148 = scmp.ne.s32.totalorder %s140, %s142
      %p149 = scmp.eq.s32.totalorder %s27, 1
      %p150 = por %p148, %p149
      %p151 = scmp.ne.s32.totalorder %s142, %s143
      %p152 = scmp.eq.s32.totalorder %s27, 0
      %p153 = por %p151, %p152
      %p154 = scmp.ne.s32.totalorder %s142, %s143
      %p155 = scmp.eq.s32.totalorder %s28, 1
      %p156 = por %p154, %p155
      %p158 = scmp.ne.s32.totalorder %s143, %s157
      %p159 = scmp.eq.s32.totalorder %s28, 0
      %p160 = por %p158, %p159
      %s162 = sadd.s32 %s161, 1
      %p165 = scmp.eq.s32.totalorder %s22, 1
      %p166 = scmp.ne.s32.totalorder %s161, %s163
      %p167 = scmp.eq.s32.totalorder %s22, 0
      %p168 = por %p166, %p167
      %p169 = scmp.ne.s32.totalorder %s161, %s163
      %p170 = scmp.eq.s32.totalorder %s27, 1
      %p171 = por %p169, %p170
      %p172 = scmp.ne.s32.totalorder %s163, %s164
      %p173 = scmp.eq.s32.totalorder %s27, 0
      %p174 = por %p172, %p173
      %p175 = scmp.ne.s32.totalorder %s163, %s164
      %p176 = scmp.eq.s32.totalorder %s28, 1
      %p177 = por %p175, %p176
      %p179 = scmp.ne.s32.totalorder %s164, %s178
      %p180 = scmp.eq.s32.totalorder %s28, 0
      %p181 = por %p179, %p180
      %s182 = ssub.s32 %s22, %s29
      %p183 = scmp.eq.s32.totalorder %s182, 0
      %s185 = sadd.s32 %s184, 1
      %s186 = scalar_select %p183, %s184, %s185
      %p189 = pneg %p183
      %p190 = scmp.eq.s32.totalorder %s22, 1
      %p191 = por %p189, %p190
      %p192 = scmp.ne.s32.totalorder %s184, %s187
      %p193 = scmp.eq.s32.totalorder %s22, 0
      %p194 = por %p192, %p193
      %p195 = scmp.ne.s32.totalorder %s184, %s187
      %p196 = scmp.eq.s32.totalorder %s27, 1
      %p197 = por %p195, %p196
      %p198 = scmp.ne.s32.totalorder %s187, %s188
      %p199 = scmp.eq.s32.totalorder %s27, 0
      %p200 = por %p198, %p199
      %p201 = scmp.ne.s32.totalorder %s187, %s188
      %p202 = scmp.eq.s32.totalorder %s28, 1
      %p203 = por %p201, %p202
      %p205 = scmp.ne.s32.totalorder %s188, %s204
      %p206 = scmp.eq.s32.totalorder %s28, 0
      %p207 = por %p205, %p206
      %s208 = ssub.s32 %s22, %s29
      %p209 = scmp.eq.s32.totalorder %s208, 0
      %s211 = sadd.s32 %s210, 1
      %s212 = scalar_select %p209, %s210, %s211
      %p215 = pneg %p209
      %p216 = scmp.eq.s32.totalorder %s22, 1
      %p217 = por %p215, %p216
      %p218 = scmp.ne.s32.totalorder %s210, %s213
      %p219 = scmp.eq.s32.totalorder %s22, 0
      %p220 = por %p218, %p219
      %p221 = scmp.ne.s32.totalorder %s210, %s213
      %p222 = scmp.eq.s32.totalorder %s27, 1
      %p223 = por %p221, %p222
      %p224 = scmp.ne.s32.totalorder %s213, %s214
      %p225 = scmp.eq.s32.totalorder %s27, 0
      %p226 = por %p224, %p225
      %p227 = scmp.ne.s32.totalorder %s213, %s214
      %p228 = scmp.eq.s32.totalorder %s28, 1
      %p229 = por %p227, %p228
      %p231 = scmp.ne.s32.totalorder %s214, %s230
      %p232 = scmp.eq.s32.totalorder %s28, 0
      %p233 = por %p231, %p232
      %p234 = scmp.le.s32.totalorder 1, %s22
      %p235 = scmp.lt.s32.totalorder %s22, 3
      %p236 = pnand %p234, %p235
      %p237 = pneg %p236
      // Predicated region
      $region9: #{tpu_custom_call.1} parent=5 // pred_check
        _
      $region10: #{tpu_custom_call.1} parent=5 // pred_check_branch
        %239 = sbr.rel (%p236) target = $region12
      $region11: #{tpu_custom_call.1} parent=5 // pred_region
        %s240 = ssub.s32 %s22, 1
        // Predicated region
        $region13: #{tpu_custom_call.1} parent=11 // pred_check
          %p241 = pneg %p69
        $region14: #{tpu_custom_call.1} parent=11 // pred_check_branch
          %243 = sbr.rel (%p241) target = $region16
        $region15: #{tpu_custom_call.1} parent=11 // pred_region
          %s245 = ssub.s32 2048, 2048
          %246 = vsyncadd [#allocation6], %s245
          %s247 = sshll.u32 [#allocation5], 4
          %s248 = int_to_ptr.vmem [resolvable:$true] %s247
          %253 = dma.hbm_to_vmem [thread:$0]  %s1, 2048, %s248, [#allocation6], 128, 128, 8
        $region16: #{tpu_custom_call.1} parent=11 // pred_fallthru
          _
        // Predicated region
        $region17: #{tpu_custom_call.1} parent=11 // pred_check
          %p254 = pneg %p90
        $region18: #{tpu_custom_call.1} parent=11 // pred_check_branch
          %256 = sbr.rel (%p254) target = $region20
        $region19: #{tpu_custom_call.1} parent=11 // pred_region
          _
        $region20: #{tpu_custom_call.1} parent=11 // pred_fallthru
          _
        // Predicated region
        $region21: #{tpu_custom_call.1} parent=11 // pred_check
          %p257 = pneg %p111
        $region22: #{tpu_custom_call.1} parent=11 // pred_check_branch
          %259 = sbr.rel (%p257) target = $region24
        $region23: #{tpu_custom_call.1} parent=11 // pred_region
          %s261 = ssub.s32 2048, 2048
          %262 = vsyncadd [#allocation6], %s261
          %s263 = sshll.u32 [#allocation7], 4
          %s264 = int_to_ptr.vmem [resolvable:$true] %s263
          %269 = dma.hbm_to_vmem [thread:$0]  %s3, 2048, %s264, [#allocation6], 128, 128, 8
        $region24: #{tpu_custom_call.1} parent=11 // pred_fallthru
          _
        // Predicated region
        $region25: #{tpu_custom_call.1} parent=11 // pred_check
          %p270 = pneg %p132
        $region26: #{tpu_custom_call.1} parent=11 // pred_check_branch
          %272 = sbr.rel (%p270) target = $region28
        $region27: #{tpu_custom_call.1} parent=11 // pred_region
          _
        $region28: #{tpu_custom_call.1} parent=11 // pred_fallthru
          _
        // Predicated region
        $region29: #{tpu_custom_call.1} parent=11 // pred_check
          %p273 = pneg %p153
        $region30: #{tpu_custom_call.1} parent=11 // pred_check_branch
          %275 = sbr.rel (%p273) target = $region32
        $region31: #{tpu_custom_call.1} parent=11 // pred_region
          %s277 = ssub.s32 4096, 4096
          %278 = vsyncadd [#allocation9], %s277
          %s279 = sshll.u32 [#allocation8], 4
          %s280 = int_to_ptr.vmem [resolvable:$true] %s279
          %285 = dma.hbm_to_vmem [thread:$0]  %s5, 4096, %s280, [#allocation9], 256, 256, 16
        $region32: #{tpu_custom_call.1} parent=11 // pred_fallthru
          _
        // Predicated region
        $region33: #{tpu_custom_call.1} parent=11 // pred_check
          %p286 = pneg %p174
        $region34: #{tpu_custom_call.1} parent=11 // pred_check_branch
          %288 = sbr.rel (%p286) target = $region36
        $region35: #{tpu_custom_call.1} parent=11 // pred_region
          _
        $region36: #{tpu_custom_call.1} parent=11 // pred_fallthru
          _
      $region12: #{tpu_custom_call.1} parent=5 // pred_fallthru
        _
      %p289 = scmp.lt.s32.totalorder %s22, 2
      // Predicated region
      $region37: #{tpu_custom_call.1} parent=5 // pred_check
        %p290 = pneg %p289
      $region38: #{tpu_custom_call.1} parent=5 // pred_check_branch
        %292 = sbr.rel (%p290) target = $region40
      $region39: #{tpu_custom_call.1} parent=5 // pred_region
        // Predicated region
        $region41: #{tpu_custom_call.1} parent=39 // pred_check
          %p293 = pneg %p42
        $region42: #{tpu_custom_call.1} parent=39 // pred_check_branch
          %295 = sbr.rel (%p293) target = $region44
        $region43: #{tpu_custom_call.1} parent=39 // pred_region
          %s296 = sand.u32 %s22, 1
          %s297 = scalar_lea.sflag [#allocation3], %s296
          %s298 = sand.u32 %s32, 1
          %s299 = smul.addr %s298, 24
          %s300 = scalar_lea.vmem [#allocation2], %s299
          %s301 = smul.u32 3, %s22
          %s303 = ssub.s32 384, 384
          %304 = vsyncadd %s297, %s303
          %s305 = smul.addr %s301, 128
          %s306 = scalar_lea.hbm %s0, %s305
          %s307 = sshll.u32 %s300, 4
          %s308 = int_to_ptr.vmem [resolvable:$true] %s307
          %313 = dma.hbm_to_vmem [thread:$0]  %s306, 384, %s308, %s297, 128, 128, 8
        $region44: #{tpu_custom_call.1} parent=39 // pred_fallthru
          _
        // Predicated region
        $region45: #{tpu_custom_call.1} parent=39 // pred_check
          %p314 = pneg %p194
        $region46: #{tpu_custom_call.1} parent=39 // pred_check_branch
          %316 = sbr.rel (%p314) target = $region48
        $region47: #{tpu_custom_call.1} parent=39 // pred_region
          %s317 = sand.u32 %s22, 1
          %s318 = scalar_lea.sflag [#allocation3], %s317
          %s319 = sand.u32 %s184, 1
          %s320 = smul.addr %s319, 24
          %s321 = scalar_lea.vmem [#allocation10], %s320
          %s322 = smul.u32 3, %s22
          %s324 = ssub.s32 384, 384
          %325 = vsyncadd %s318, %s324
          %s326 = smul.addr %s322, 128
          %s327 = scalar_lea.hbm %s7, %s326
          %s328 = sshll.u32 %s321, 4
          %s329 = int_to_ptr.vmem [resolvable:$true] %s328
          %334 = dma.hbm_to_vmem [thread:$0]  %s327, 384, %s329, %s318, 128, 128, 8
        $region48: #{tpu_custom_call.1} parent=39 // pred_fallthru
          _
      $region40: #{tpu_custom_call.1} parent=5 // pred_fallthru
        _
      %p335 = scmp.le.s32.totalorder 1, %s22
      %p336 = scmp.lt.s32.totalorder %s22, 3
      %p337 = pnand %p335, %p336
      %p338 = pneg %p337
      // Predicated region
      $region49: #{tpu_custom_call.1} parent=5 // pred_check
        _
      $region50: #{tpu_custom_call.1} parent=5 // pred_check_branch
        %340 = sbr.rel (%p337) target = $region52
      $region51: #{tpu_custom_call.1} parent=5 // pred_region
        %s341 = ssub.s32 %s22, 1
        %s342 = sand.u32 %s27, 1
        %s343 = scalar_lea.sflag [#allocation3], %s342
        %s344 = sand.u32 %s35, 1
        %s345 = smul.addr %s344, 24
        %s346 = scalar_lea.vmem [#allocation2], %s345
        // Predicated region
        $region53: #{tpu_custom_call.1} parent=51 // pred_check
          %p347 = pneg %p48
        $region54: #{tpu_custom_call.1} parent=51 // pred_check_branch
          %349 = sbr.rel (%p347) target = $region56
        $region55: #{tpu_custom_call.1} parent=51 // pred_region
          %350 = dma.done %s343, 384
        $region56: #{tpu_custom_call.1} parent=51 // pred_fallthru
          _
        // Predicated region
        $region57: #{tpu_custom_call.1} parent=51 // pred_check
          %p351 = pneg %p69
        $region58: #{tpu_custom_call.1} parent=51 // pred_check_branch
          %353 = sbr.rel (%p351) target = $region60
        $region59: #{tpu_custom_call.1} parent=51 // pred_region
          %354 = dma.done [#allocation6], 2048
        $region60: #{tpu_custom_call.1} parent=51 // pred_fallthru
          _
        // Predicated region
        $region61: #{tpu_custom_call.1} parent=51 // pred_check
          %p355 = pneg %p111
        $region62: #{tpu_custom_call.1} parent=51 // pred_check_branch
          %357 = sbr.rel (%p355) target = $region64
        $region63: #{tpu_custom_call.1} parent=51 // pred_region
          %358 = dma.done [#allocation6], 2048
        $region64: #{tpu_custom_call.1} parent=51 // pred_fallthru
          _
        // Predicated region
        $region65: #{tpu_custom_call.1} parent=51 // pred_check
          %p359 = pneg %p153
        $region66: #{tpu_custom_call.1} parent=51 // pred_check_branch
          %361 = sbr.rel (%p359) target = $region68
        $region67: #{tpu_custom_call.1} parent=51 // pred_region
          %362 = dma.done [#allocation9], 4096
        $region68: #{tpu_custom_call.1} parent=51 // pred_fallthru
          _
        %s363 = sand.u32 %s27, 1
        %s364 = scalar_lea.sflag [#allocation3], %s363
        %s365 = sand.u32 %s187, 1
        %s366 = smul.addr %s365, 24
        %s367 = scalar_lea.vmem [#allocation10], %s366
        // Predicated region
        $region69: #{tpu_custom_call.1} parent=51 // pred_check
          %p368 = pneg %p200
        $region70: #{tpu_custom_call.1} parent=51 // pred_check_branch
          %370 = sbr.rel (%p368) target = $region72
        $region71: #{tpu_custom_call.1} parent=51 // pred_region
          %371 = dma.done %s364, 384
        $region72: #{tpu_custom_call.1} parent=51 // pred_fallthru
          _
        %s372 = sand.u32 %s27, 1
        %s373 = scalar_lea.sflag [#allocation3], %s372
        %s374 = sand.u32 %s35, 1
        %s375 = smul.addr %s374, 24
        %s376 = scalar_lea.vmem [#allocation2], %s375
        %p377 = pneg %p48
        %p378 = pneg %p45
        %p379 = pneg %p69
        %p380 = pneg %p66
        %p381 = pneg %p90
        %p382 = pneg %p87
        %p383 = pneg %p111
        %p384 = pneg %p108
        %p385 = pneg %p132
        %p386 = pneg %p129
        %p387 = pneg %p153
        %p388 = pneg %p150
        %p389 = pneg %p174
        %p390 = pneg %p171
        %s391 = sand.u32 %s27, 1
        %s392 = scalar_lea.sflag [#allocation3], %s391
        %s393 = sand.u32 %s187, 1
        %s394 = smul.addr %s393, 24
        %s395 = scalar_lea.vmem [#allocation10], %s394
        %p396 = pneg %p200
        %p397 = pneg %p197
        %p398 = pneg %p226
        %p399 = pneg %p223
        %s400 = sand.u32 %s213, 1
        %s401 = scalar_lea.sflag [#allocation4], %s400
        %s402 = sand.u32 %s213, 1
        %s403 = smul.addr %s402, 72
        %s404 = scalar_lea.vmem [#allocation11], %s403
        %s405 = smul.u32 3, %s27
        %s406 = smul.u32 3, %s27
        %s407 = smul.u32 3, %s27
        %v408 = vld [vmem:[%s346] sm:$0xff]
        %v409 = vld [vmem:[%s346 + $0x8] sm:$0xff]
        %v410 = vld [vmem:[%s346 + $0x10] sm:$0xff]
        %v411 = vld [vmem:[#allocation5] sm:$0xff]
        %v412 = vld [vmem:[#allocation5 + $0x8] sm:$0xff]
        %v413 = vld [vmem:[#allocation5 + $0x10] sm:$0xff]
        %v414 = vld [vmem:[#allocation5 + $0x18] sm:$0xff]
        %v415 = vld [vmem:[#allocation5 + $0x20] sm:$0xff]
        %v416 = vld [vmem:[#allocation5 + $0x28] sm:$0xff]
        %v417 = vld [vmem:[#allocation5 + $0x30] sm:$0xff]
        %v418 = vld [vmem:[#allocation5 + $0x38] sm:$0xff]
        %v419 = vld [vmem:[#allocation5 + $0x40] sm:$0xff]
        %v420 = vld [vmem:[#allocation5 + $0x48] sm:$0xff]
        %v421 = vld [vmem:[#allocation5 + $0x50] sm:$0xff]
        %v422 = vld [vmem:[#allocation5 + $0x58] sm:$0xff]
        %v423 = vld [vmem:[#allocation5 + $0x60] sm:$0xff]
        %v424 = vld [vmem:[#allocation5 + $0x68] sm:$0xff]
        %v425 = vld [vmem:[#allocation5 + $0x70] sm:$0xff]
        %v426 = vld [vmem:[#allocation5 + $0x78] sm:$0xff]
        %v427 = vld [vmem:[%s2] sm:$0x1]
        %v429 = vlaneseq
        %v430 = vshrl.u32 %v429, 7
        %v431 = vsub.s32 0, %v430
        %v432 = vrot.slane %v427, %v431
        %434 = vmatprep.subr.mxu0 0.0
        %435 = vmatpush1.msra.mxu0 %v411
        %436 = vmatprep.subr.mxu0 0.0
        %437 = vmatpush1.msra.mxu0 %v412
        %438 = vmatprep.subr.mxu0 0.0
        %439 = vmatpush1.msra.mxu0 %v413
        %440 = vmatprep.subr.mxu0 0.0
        %441 = vmatpush1.msra.mxu0 %v414
        %442 = vmatprep.subr.mxu0 0.0
        %443 = vmatpush1.msra.mxu0 %v415
        %444 = vmatprep.subr.mxu0 0.0
        %445 = vmatpush1.msra.mxu0 %v416
        %446 = vmatprep.subr.mxu0 0.0
        %447 = vmatpush1.msra.mxu0 %v417
        %448 = vmatprep.subr.mxu0 0.0
        %449 = vmatpush1.msra.mxu0 %v418
        %450 = vmatprep.subr.mxu0 0.0
        %451 = vmatpush1.msra.mxu0 %v419
        %452 = vmatprep.subr.mxu0 0.0
        %453 = vmatpush1.msra.mxu0 %v420
        %454 = vmatprep.subr.mxu0 0.0
        %455 = vmatpush1.msra.mxu0 %v421
        %456 = vmatprep.subr.mxu0 0.0
        %457 = vmatpush1.msra.mxu0 %v422
        %458 = vmatprep.subr.mxu0 0.0
        %459 = vmatpush1.msra.mxu0 %v423
        %460 = vmatprep.subr.mxu0 0.0
        %461 = vmatpush1.msra.mxu0 %v424
        %462 = vmatprep.subr.mxu0 0.0
        %463 = vmatpush1.msra.mxu0 %v425
        %464 = vmatprep.subr.mxu0 0.0
        %465 = vmatpush1.msra.mxu0 %v426
        %466 = vmatprep.subr.mxu0 0.0
        %467 = vmatpush1.msra.mxu0 0.0
        %468 = vmatprep.subr.mxu0 0.0
        %469 = vmatpush1.msra.mxu0 0.0
        %470 = vmatprep.subr.mxu0 0.0
        %471 = vmatpush1.msra.mxu0 0.0
        %472 = vmatprep.subr.mxu0 0.0
        %473 = vmatpush1.msra.mxu0 0.0
        %474 = vmatprep.subr.mxu0 0.0
        %475 = vmatpush1.msra.mxu0 0.0
        %476 = vmatprep.subr.mxu0 0.0
        %477 = vmatpush1.msra.mxu0 0.0
        %478 = vmatprep.subr.mxu0 0.0
        %479 = vmatpush1.msra.mxu0 0.0
        %480 = vmatprep.subr.mxu0 0.0
        %481 = vmatpush1.msra.mxu0 0.0
        %482 = vmatprep.subr.mxu0 0.0
        %483 = vmatpush1.msra.mxu0 0.0
        %484 = vmatprep.subr.mxu0 0.0
        %485 = vmatpush1.msra.mxu0 0.0
        %486 = vmatprep.subr.mxu0 0.0
        %487 = vmatpush1.msra.mxu0 0.0
        %488 = vmatprep.subr.mxu0 0.0
        %489 = vmatpush1.msra.mxu0 0.0
        %490 = vmatprep.subr.mxu0 0.0
        %491 = vmatpush1.msra.mxu0 0.0
        %492 = vmatprep.subr.mxu0 0.0
        %493 = vmatpush1.msra.mxu0 0.0
        %494 = vmatprep.subr.mxu0 0.0
        %495 = vmatpush1.msra.mxu0 0.0
        %496 = vmatprep.subr.mxu0 0.0
        %497 = vmatpush1.msra.mxu0 0.0
        %498 = vmatprep.mubr.f32.mxu0 0.0
        %499 = vmatmul.mubr.f32.gmra.mrb[0].mxu0 %v408
        %v500 = vpop.f32.mrb[0].mxu0
        %v501 = vadd.f32 %v432, %v500
        %v502 = vpop.f32.mrb[0].mxu0
        %503 = vmatprep.mubr.f32.mxu0 0.0
        %504 = vmatmul.mubr.f32.gmra.mrb[0].mxu0 %v409
        %v505 = vpop.f32.mrb[0].mxu0
        %v506 = vadd.f32 %v432, %v505
        %v507 = vpop.f32.mrb[0].mxu0
        %508 = vmatprep.mubr.f32.mxu0 0.0
        %509 = vmatmul.mubr.f32.gmra.mrb[0].mxu0 %v410
        %v510 = vpop.f32.mrb[0].mxu0
        %v511 = vadd.f32 %v432, %v510
        %v512 = vpop.f32.mrb[0].mxu0
        %513 = vdwg.mxu0
        %v514 = vmax.f32 %v501, 0.0
        %v515 = vmax.f32 %v506, 0.0
        %v516 = vmax.f32 %v511, 0.0
        %v517 = vld [vmem:[#allocation7] sm:$0xff]
        %v518 = vld [vmem:[#allocation7 + $0x8] sm:$0xff]
        %v519 = vld [vmem:[#allocation7 + $0x10] sm:$0xff]
        %v520 = vld [vmem:[#allocation7 + $0x18] sm:$0xff]
        %v521 = vld [vmem:[#allocation7 + $0x20] sm:$0xff]
        %v522 = vld [vmem:[#allocation7 + $0x28] sm:$0xff]
        %v523 = vld [vmem:[#allocation7 + $0x30] sm:$0xff]
        %v524 = vld [vmem:[#allocation7 + $0x38] sm:$0xff]
        %v525 = vld [vmem:[#allocation7 + $0x40] sm:$0xff]
        %v526 = vld [vmem:[#allocation7 + $0x48] sm:$0xff]
        %v527 = vld [vmem:[#allocation7 + $0x50] sm:$0xff]
        %v528 = vld [vmem:[#allocation7 + $0x58] sm:$0xff]
        %v529 = vld [vmem:[#allocation7 + $0x60] sm:$0xff]
        %v530 = vld [vmem:[#allocation7 + $0x68] sm:$0xff]
        %v531 = vld [vmem:[#allocation7 + $0x70] sm:$0xff]
        %v532 = vld [vmem:[#allocation7 + $0x78] sm:$0xff]
        %v533 = vld [vmem:[%s4] sm:$0x1]
        %v535 = vlaneseq
        %v536 = vshrl.u32 %v535, 7
        %v537 = vsub.s32 0, %v536
        %v538 = vrot.slane %v533, %v537
        %540 = vmatprep.subr.mxu0 0.0
        %541 = vmatpush1.msra.mxu0 %v517
        %542 = vmatprep.subr.mxu0 0.0
        %543 = vmatpush1.msra.mxu0 %v518
        %544 = vmatprep.subr.mxu0 0.0
        %545 = vmatpush1.msra.mxu0 %v519
        %546 = vmatprep.subr.mxu0 0.0
        %547 = vmatpush1.msra.mxu0 %v520
        %548 = vmatprep.subr.mxu0 0.0
        %549 = vmatpush1.msra.mxu0 %v521
        %550 = vmatprep.subr.mxu0 0.0
        %551 = vmatpush1.msra.mxu0 %v522
        %552 = vmatprep.subr.mxu0 0.0
        %553 = vmatpush1.msra.mxu0 %v523
        %554 = vmatprep.subr.mxu0 0.0
        %555 = vmatpush1.msra.mxu0 %v524
        %556 = vmatprep.subr.mxu0 0.0
        %557 = vmatpush1.msra.mxu0 %v525
        %558 = vmatprep.subr.mxu0 0.0
        %559 = vmatpush1.msra.mxu0 %v526
        %560 = vmatprep.subr.mxu0 0.0
        %561 = vmatpush1.msra.mxu0 %v527
        %562 = vmatprep.subr.mxu0 0.0
        %563 = vmatpush1.msra.mxu0 %v528
        %564 = vmatprep.subr.mxu0 0.0
        %565 = vmatpush1.msra.mxu0 %v529
        %566 = vmatprep.subr.mxu0 0.0
        %567 = vmatpush1.msra.mxu0 %v530
        %568 = vmatprep.subr.mxu0 0.0
        %569 = vmatpush1.msra.mxu0 %v531
        %570 = vmatprep.subr.mxu0 0.0
        %571 = vmatpush1.msra.mxu0 %v532
        %572 = vmatprep.subr.mxu0 0.0
        %573 = vmatpush1.msra.mxu0 0.0
        %574 = vmatprep.subr.mxu0 0.0
        %575 = vmatpush1.msra.mxu0 0.0
        %576 = vmatprep.subr.mxu0 0.0
        %577 = vmatpush1.msra.mxu0 0.0
        %578 = vmatprep.subr.mxu0 0.0
        %579 = vmatpush1.msra.mxu0 0.0
        %580 = vmatprep.subr.mxu0 0.0
        %581 = vmatpush1.msra.mxu0 0.0
        %582 = vmatprep.subr.mxu0 0.0
        %583 = vmatpush1.msra.mxu0 0.0
        %584 = vmatprep.subr.mxu0 0.0
        %585 = vmatpush1.msra.mxu0 0.0
        %586 = vmatprep.subr.mxu0 0.0
        %587 = vmatpush1.msra.mxu0 0.0
        %588 = vmatprep.subr.mxu0 0.0
        %589 = vmatpush1.msra.mxu0 0.0
        %590 = vmatprep.subr.mxu0 0.0
        %591 = vmatpush1.msra.mxu0 0.0
        %592 = vmatprep.subr.mxu0 0.0
        %593 = vmatpush1.msra.mxu0 0.0
        %594 = vmatprep.subr.mxu0 0.0
        %595 = vmatpush1.msra.mxu0 0.0
        %596 = vmatprep.subr.mxu0 0.0
        %597 = vmatpush1.msra.mxu0 0.0
        %598 = vmatprep.subr.mxu0 0.0
        %599 = vmatpush1.msra.mxu0 0.0
        %600 = vmatprep.subr.mxu0 0.0
        %601 = vmatpush1.msra.mxu0 0.0
        %602 = vmatprep.subr.mxu0 0.0
        %603 = vmatpush1.msra.mxu0 0.0
        %604 = vmatprep.mubr.f32.mxu0 0.0
        %605 = vmatmul.mubr.f32.gmra.mrb[0].mxu0 %v514
        %v606 = vpop.f32.mrb[0].mxu0
        %v607 = vadd.f32 %v538, %v606
        %v608 = vpop.f32.mrb[0].mxu0
        %609 = vmatprep.mubr.f32.mxu0 0.0
        %610 = vmatmul.mubr.f32.gmra.mrb[0].mxu0 %v515
        %v611 = vpop.f32.mrb[0].mxu0
        %v612 = vadd.f32 %v538, %v611
        %v613 = vpop.f32.mrb[0].mxu0
        %614 = vmatprep.mubr.f32.mxu0 0.0
        %615 = vmatmul.mubr.f32.gmra.mrb[0].mxu0 %v516
        %v616 = vpop.f32.mrb[0].mxu0
        %v617 = vadd.f32 %v538, %v616
        %v618 = vpop.f32.mrb[0].mxu0
        %619 = vdwg.mxu0
        %v620 = vmax.f32 %v607, 0.0
        %v621 = vmax.f32 %v612, 0.0
        %v622 = vmax.f32 %v617, 0.0
        %v623 = vld [vmem:[#allocation8] sm:$0xff]
        %v624 = vld [vmem:[#allocation8 + $0x8] sm:$0xff]
        %v625 = vld [vmem:[#allocation8 + $0x10] sm:$0xff]
        %v626 = vld [vmem:[#allocation8 + $0x18] sm:$0xff]
        %v627 = vld [vmem:[#allocation8 + $0x20] sm:$0xff]
        %v628 = vld [vmem:[#allocation8 + $0x28] sm:$0xff]
        %v629 = vld [vmem:[#allocation8 + $0x30] sm:$0xff]
        %v630 = vld [vmem:[#allocation8 + $0x38] sm:$0xff]
        %v631 = vld [vmem:[#allocation8 + $0x40] sm:$0xff]
        %v632 = vld [vmem:[#allocation8 + $0x48] sm:$0xff]
        %v633 = vld [vmem:[#allocation8 + $0x50] sm:$0xff]
        %v634 = vld [vmem:[#allocation8 + $0x58] sm:$0xff]
        %v635 = vld [vmem:[#allocation8 + $0x60] sm:$0xff]
        %v636 = vld [vmem:[#allocation8 + $0x68] sm:$0xff]
        %v637 = vld [vmem:[#allocation8 + $0x70] sm:$0xff]
        %v638 = vld [vmem:[#allocation8 + $0x78] sm:$0xff]
        %v639 = vld [vmem:[#allocation8 + $0x80] sm:$0xff]
        %v640 = vld [vmem:[#allocation8 + $0x88] sm:$0xff]
        %v641 = vld [vmem:[#allocation8 + $0x90] sm:$0xff]
        %v642 = vld [vmem:[#allocation8 + $0x98] sm:$0xff]
        %v643 = vld [vmem:[#allocation8 + $0xa0] sm:$0xff]
        %v644 = vld [vmem:[#allocation8 + $0xa8] sm:$0xff]
        %v645 = vld [vmem:[#allocation8 + $0xb0] sm:$0xff]
        %v646 = vld [vmem:[#allocation8 + $0xb8] sm:$0xff]
        %v647 = vld [vmem:[#allocation8 + $0xc0] sm:$0xff]
        %v648 = vld [vmem:[#allocation8 + $0xc8] sm:$0xff]
        %v649 = vld [vmem:[#allocation8 + $0xd0] sm:$0xff]
        %v650 = vld [vmem:[#allocation8 + $0xd8] sm:$0xff]
        %v651 = vld [vmem:[#allocation8 + $0xe0] sm:$0xff]
        %v652 = vld [vmem:[#allocation8 + $0xe8] sm:$0xff]
        %v653 = vld [vmem:[#allocation8 + $0xf0] sm:$0xff]
        %v654 = vld [vmem:[#allocation8 + $0xf8] sm:$0xff]
        %v655 = vld [vmem:[%s6] sm:$0x3]
        %v657 = vlaneseq
        %v658 = vshrl.u32 %v657, 7
        %v659 = vsub.s32 0, %v658
        %v660 = vrot.slane %v655, %v659
        %v661 = vlaneseq
        %v662 = vshrl.u32 %v661, 7
        %v663 = vsub.s32 1, %v662
        %v664 = vrot.slane %v655, %v663
        %667 = vmatprep.subr.mxu0 %v624
        %668 = vmatpush1.msra.mxu0 %v623
        %669 = vmatprep.subr.mxu0 %v626
        %670 = vmatpush1.msra.mxu0 %v625
        %671 = vmatprep.subr.mxu0 %v628
        %672 = vmatpush1.msra.mxu0 %v627
        %673 = vmatprep.subr.mxu0 %v630
        %674 = vmatpush1.msra.mxu0 %v629
        %675 = vmatprep.subr.mxu0 %v632
        %676 = vmatpush1.msra.mxu0 %v631
        %677 = vmatprep.subr.mxu0 %v634
        %678 = vmatpush1.msra.mxu0 %v633
        %679 = vmatprep.subr.mxu0 %v636
        %680 = vmatpush1.msra.mxu0 %v635
        %681 = vmatprep.subr.mxu0 %v638
        %682 = vmatpush1.msra.mxu0 %v637
        %683 = vmatprep.subr.mxu0 %v640
        %684 = vmatpush1.msra.mxu0 %v639
        %685 = vmatprep.subr.mxu0 %v642
        %686 = vmatpush1.msra.mxu0 %v641
        %687 = vmatprep.subr.mxu0 %v644
        %688 = vmatpush1.msra.mxu0 %v643
        %689 = vmatprep.subr.mxu0 %v646
        %690 = vmatpush1.msra.mxu0 %v645
        %691 = vmatprep.subr.mxu0 %v648
        %692 = vmatpush1.msra.mxu0 %v647
        %693 = vmatprep.subr.mxu0 %v650
        %694 = vmatpush1.msra.mxu0 %v649
        %695 = vmatprep.subr.mxu0 %v652
        %696 = vmatpush1.msra.mxu0 %v651
        %697 = vmatprep.subr.mxu0 %v654
        %698 = vmatpush1.msra.mxu0 %v653
        %699 = vmatprep.subr.mxu0 0.0
        %700 = vmatpush1.msra.mxu0 0.0
        %701 = vmatprep.subr.mxu0 0.0
        %702 = vmatpush1.msra.mxu0 0.0
        %703 = vmatprep.subr.mxu0 0.0
        %704 = vmatpush1.msra.mxu0 0.0
        %705 = vmatprep.subr.mxu0 0.0
        %706 = vmatpush1.msra.mxu0 0.0
        %707 = vmatprep.subr.mxu0 0.0
        %708 = vmatpush1.msra.mxu0 0.0
        %709 = vmatprep.subr.mxu0 0.0
        %710 = vmatpush1.msra.mxu0 0.0
        %711 = vmatprep.subr.mxu0 0.0
        %712 = vmatpush1.msra.mxu0 0.0
        %713 = vmatprep.subr.mxu0 0.0
        %714 = vmatpush1.msra.mxu0 0.0
        %715 = vmatprep.subr.mxu0 0.0
        %716 = vmatpush1.msra.mxu0 0.0
        %717 = vmatprep.subr.mxu0 0.0
        %718 = vmatpush1.msra.mxu0 0.0
        %719 = vmatprep.subr.mxu0 0.0
        %720 = vmatpush1.msra.mxu0 0.0
        %721 = vmatprep.subr.mxu0 0.0
        %722 = vmatpush1.msra.mxu0 0.0
        %723 = vmatprep.subr.mxu0 0.0
        %724 = vmatpush1.msra.mxu0 0.0
        %725 = vmatprep.subr.mxu0 0.0
        %726 = vmatpush1.msra.mxu0 0.0
        %727 = vmatprep.subr.mxu0 0.0
        %728 = vmatpush1.msra.mxu0 0.0
        %729 = vmatprep.subr.mxu0 0.0
        %730 = vmatpush1.msra.mxu0 0.0
        %731 = vmatprep.mubr.f32.mxu0 0.0
        %732 = vmatmul.mubr.f32.gmra.mrb[0].mxu0 %v620
        %v733 = vpop.f32.mrb[0].mxu0
        %v734 = vadd.f32 %v660, %v733
        %v735 = vpop.f32.mrb[0].mxu0
        %v736 = vadd.f32 %v664, %v735
        %737 = vmatprep.mubr.f32.mxu0 0.0
        %738 = vmatmul.mubr.f32.gmra.mrb[0].mxu0 %v621
        %v739 = vpop.f32.mrb[0].mxu0
        %v740 = vadd.f32 %v660, %v739
        %v741 = vpop.f32.mrb[0].mxu0
        %v742 = vadd.f32 %v664, %v741
        %743 = vmatprep.mubr.f32.mxu0 0.0
        %744 = vmatmul.mubr.f32.gmra.mrb[0].mxu0 %v622
        %v745 = vpop.f32.mrb[0].mxu0
        %v746 = vadd.f32 %v660, %v745
        %v747 = vpop.f32.mrb[0].mxu0
        %v748 = vadd.f32 %v664, %v747
        %749 = vdwg.mxu0
        %v750 = vtanh.pop %v736
        %v751 = vtanh.pop %v742
        %v752 = vtanh.pop %v748
        %v753 = vadd.f32 %v750, 1.0
        %v754 = vadd.f32 %v751, 1.0
        %v755 = vadd.f32 %v752, 1.0
        %v756 = vmul.f32 %v753, 3.5
        %v757 = vmul.f32 %v754, 3.5
        %v758 = vmul.f32 %v755, 3.5
        %v759 = vadd.f32 %v756, -5.0
        %v760 = vadd.f32 %v757, -5.0
        %v761 = vadd.f32 %v758, -5.0
        %v762 = vmul.f32 %v759, 1.442695
        %v763 = vpow.pop %v762
        %v764 = vmul.f32 %v760, 1.442695
        %v765 = vpow.pop %v764
        %v766 = vmul.f32 %v761, 1.442695
        %v767 = vpow.pop %v766
        %v768 = vld [vmem:[%s367] sm:$0xff]
        %v769 = vld [vmem:[%s367 + $0x8] sm:$0xff]
        %v770 = vld [vmem:[%s367 + $0x10] sm:$0xff]
        %v771 = vtanh.pop %v734
        %v772 = vtanh.pop %v740
        %v773 = vtanh.pop %v746
        %774 = vst [vmem:[%s404] sm:$0xff] %v771
        %775 = vst [vmem:[%s404 + $0x18] sm:$0xff] %v772
        %776 = vst [vmem:[%s404 + $0x30] sm:$0xff] %v773
        %v777 = vmul.f32 %v763, %v768
        %v778 = vmul.f32 %v765, %v769
        %v779 = vmul.f32 %v767, %v770
        %v780 = vadd.f32 %v734, %v777
        %v781 = vadd.f32 %v740, %v778
        %v782 = vadd.f32 %v746, %v779
        %783 = vst [vmem:[%s404 + $0x8] sm:$0xff] %v780
        %784 = vst [vmem:[%s404 + $0x20] sm:$0xff] %v781
        %785 = vst [vmem:[%s404 + $0x38] sm:$0xff] %v782
        %v786 = vmul.f32 %v768, -0.5
        %v787 = vmul.f32 %v769, -0.5
        %v788 = vmul.f32 %v770, -0.5
        %v789 = vmul.f32 %v786, %v768
        %v790 = vmul.f32 %v787, %v769
        %v791 = vmul.f32 %v788, %v770
        %v792 = vsub.f32 %v789, %v759
        %v793 = vsub.f32 %v790, %v760
        %v794 = vsub.f32 %v791, %v761
        %v795 = vsub.f32 %v792, 0.9189385
        %v796 = vsub.f32 %v793, 0.9189385
        %v797 = vsub.f32 %v794, 0.9189385
        %798 = vst [vmem:[%s404 + $0x10] sm:$0xff] %v795
        %799 = vst [vmem:[%s404 + $0x28] sm:$0xff] %v796
        %800 = vst [vmem:[%s404 + $0x40] sm:$0xff] %v797
        %s801 = sand.u32 %s213, 1
        %s802 = scalar_lea.sflag [#allocation4], %s801
        %s803 = sand.u32 %s213, 1
        %s804 = smul.addr %s803, 72
        %s805 = scalar_lea.vmem [#allocation11], %s804
        // Predicated region
        $region73: #{tpu_custom_call.1} parent=51 // pred_check
          %p806 = pneg %p223
        $region74: #{tpu_custom_call.1} parent=51 // pred_check_branch
          %808 = sbr.rel (%p806) target = $region76
        $region75: #{tpu_custom_call.1} parent=51 // pred_region
          %s809 = smul.u32 3, %s27
          %s811 = ssub.s32 1152, 1152
          %812 = vsyncadd %s802, %s811
          %s813 = smul.addr %s809, 3
          %s814 = smul.addr %s813, 128
          %s815 = scalar_lea.hbm %s8, %s814
          %s816 = sshll.u32 %s805, 4
          %s817 = int_to_ptr.vmem [resolvable:$true] %s816
          %822 = dma.vmem_to_hbm [thread:$0]  %s817, 1152, %s815, %s802, 384, 384, 24
        $region76: #{tpu_custom_call.1} parent=51 // pred_fallthru
          _
      $region52: #{tpu_custom_call.1} parent=5 // pred_fallthru
        _
      %p823 = scmp.le.s32.totalorder 2, %s22
      // Predicated region
      $region77: #{tpu_custom_call.1} parent=5 // pred_check
        %p824 = pneg %p823
      $region78: #{tpu_custom_call.1} parent=5 // pred_check_branch
        %826 = sbr.rel (%p824) target = $region80
      $region79: #{tpu_custom_call.1} parent=5 // pred_region
        %s827 = ssub.s32 %s22, 2
        // Predicated region
        $region81: #{tpu_custom_call.1} parent=79 // pred_check
          %p828 = pneg %p229
        $region82: #{tpu_custom_call.1} parent=79 // pred_check_branch
          %830 = sbr.rel (%p828) target = $region84
        $region83: #{tpu_custom_call.1} parent=79 // pred_region
          %s831 = sand.u32 %s214, 1
          %s832 = scalar_lea.sflag [#allocation4], %s831
          %s833 = sand.u32 %s214, 1
          %s834 = smul.addr %s833, 72
          %s835 = scalar_lea.vmem [#allocation11], %s834
          %836 = dma.done %s832, 1152
        $region84: #{tpu_custom_call.1} parent=79 // pred_fallthru
          _
      $region80: #{tpu_custom_call.1} parent=5 // pred_fallthru
        _
    $region6: #{tpu_custom_call.1} parent=1 // loop_footer
      %s26 = sadd.s32 1, %s22
    $region7: #{tpu_custom_call.1} parent=1 // loop_footer_branch
      %21 = sbr.rel target = $region3
    $region8: #{tpu_custom_call.1} parent=1 // loop_exit
      _
    %837 = vsyncpa [#allocation3], 1
    %s838 = scalar_lea.sflag [#allocation3], 1
    %839 = vsyncpa %s838, 1
    %840 = vsyncpa [#allocation6], 1
    %841 = vsyncpa [#allocation9], 1
    %842 = vsyncpa [#allocation4], 1
    %s843 = scalar_lea.sflag [#allocation4], 1
    %844 = vsyncpa %s843, 1

</llo_original>
